<compile_context>
chip_gen: v7x
topology: tpu7x:2x2x1
jax: 0.10.0
libtpu: 0.0.40
codegen_flags: <defaults>
</compile_context>

<pallas_src>
import jax
import jax.numpy as jnp
import numpy as np
from jax.experimental import pallas as pl
from jax.experimental.pallas import tpu as pltpu


def _round_up(x, m):
    return ((x + m - 1) // m) * m


# ----------------------------------------------------------------------------
# Kernel 1: fused q|k linear projection (bf16 MXU matmul, f32 accumulate)
# ----------------------------------------------------------------------------
def _qk_fused_kernel(x_ref, w_ref, b_ref, o_ref):
    # x: (tm, M) bf16, w: (M, FP) bf16, b: (1, FP) f32, o: (tm, FP) f32
    o_ref[...] = (
        jnp.dot(x_ref[...], w_ref[...], preferred_element_type=jnp.float32)
        + b_ref[...]
    )


def qk_fused_linear(x_pack, wq, wk, bq, bk, compute_dtype=jnp.bfloat16):
    BT, M = x_pack.shape
    F = wq.shape[1]
    two_f = 2 * F
    # Pad fused output features to a full 128-lane width: unmasked vst and a
    # clean MXU tile on all generations.
    FP = _round_up(two_f, 128)

    w = jnp.concatenate([wq, wk], axis=1)              # (M, 2F)
    b = jnp.concatenate([bq, bk], axis=0)              # (2F,)
    if FP != two_f:
        w = jnp.pad(w, ((0, 0), (0, FP - two_f)))
        b = jnp.pad(b, ((0, FP - two_f),))

    # bf16 operands (MXU-native), f32 accumulate + f32 bias.
    x_c = x_pack.astype(compute_dtype)
    w_c = w.astype(compute_dtype)
    b_f32 = b.astype(jnp.float32).reshape(1, FP)

    # Row tiling: pick the biggest tile (<= 512 rows) and pad the row count so
    # the grid divides evenly (every block full -> no masked edge stores).
    tm = min(512, _round_up(BT, 8))
    BT_pad = _round_up(BT, tm)
    if BT_pad != BT:
        x_c = jnp.pad(x_c, ((0, BT_pad - BT), (0, 0)))
    grid = (BT_pad // tm,)

    in_bytes = np.dtype(compute_dtype).itemsize
    # Double-buffered x/out blocks + resident w/b (double-buffered worst case).
    vmem_est = (2 * (tm * M * in_bytes + tm * FP * 4)
                + 2 * (M * FP * in_bytes + FP * 4))
    vmem_limit = int(min(max(2 * vmem_est, 16 * 1024 * 1024), 60 * 1024 * 1024))

    out = pl.pallas_call(
        _qk_fused_kernel,
        out_shape=jax.ShapeDtypeStruct((BT_pad, FP), jnp.float32),
        grid=grid,
        in_specs=[
            pl.BlockSpec((tm, M), lambda i: (i, 0)),     # row tile of x
            pl.BlockSpec((M, FP), lambda i: (0, 0)),     # weights resident
            pl.BlockSpec((1, FP), lambda i: (0, 0)),     # bias resident
        ],
        out_specs=pl.BlockSpec((tm, FP), lambda i: (i, 0)),
        compiler_params=pltpu.CompilerParams(
            dimension_semantics=("parallel",),           # megacore-shardable
            vmem_limit_bytes=vmem_limit,
        ),
        cost_estimate=pl.CostEstimate(
            flops=2 * BT_pad * M * FP,
            transcendentals=0,
            bytes_accessed=in_bytes * (BT_pad * M + M * FP)
                           + 4 * (FP + BT_pad * FP),
        ),
    )(x_c, w_c, b_f32)

    out = out[:BT]
    return out[:, :F], out[:, F:two_f]


# ----------------------------------------------------------------------------
# Kernel 2: gather X.reshape(B*T, N*D)[idx[j]] -> out[j]   (exact row copies)
# Indices in SMEM, rows packed into (S, 128) vregs when N*D % 128 == 0.
# ----------------------------------------------------------------------------
def _gather_kernel(idx_ref, x_ref, o_ref):
    # idx_ref: (TKB,) int32 SMEM; x_ref: (R, S, L) VMEM; o_ref: (TKB, S, L) VMEM
    n_rows = o_ref.shape[0]
    n_src = x_ref.shape[0]

    def copy_row(j):
        # Clamp: VMEM reads have no runtime OOB check -> near-free insurance.
        i = jnp.clip(idx_ref[j], 0, n_src - 1)
        o_ref[j] = x_ref[i]

    if n_rows <= 64:
        for j in range(n_rows):          # unrolled at trace time (small T*K*B)
            copy_row(j)
    else:
        @pl.loop(0, n_rows)              # bounded code size for large T*K*B
        def _(j):
            copy_row(j)


def gather_topk_from_x(X, sorted_indices):
    B, T, N, D = X.shape
    Tq, K = sorted_indices.shape
    ND = N * D
    R = B * T
    TKB = B * Tq * K

    # Sublane-pack each row into full (S, 128) vregs when possible; otherwise
    # a single (1, ND) lane row.  Both reshapes below are free / contiguous.
    if ND % 128 == 0 and ND > 128:
        S, L = ND // 128, 128
    else:
        S, L = 1, ND

    x3 = X.reshape(R, S, L)              # free reshape, no transpose
    # Source row of X.reshape(B*T, ...) for output row (b, t, k): b*T + idx[t,k]
    idx = (jnp.arange(B, dtype=jnp.int32)[:, None, None] * T
           + sorted_indices[None, :, :].astype(jnp.int32)).reshape(TKB)

    # TODO(synk): for production sizes where X exceeds VMEM, tile this over
    # output-row blocks with a grid + scalar-prefetched index table.
    out = pl.pallas_call(
        _gather_kernel,
        out_shape=jax.ShapeDtypeStruct((TKB, S, L), X.dtype),
        in_specs=[
            pl.BlockSpec(memory_space=pltpu.MemorySpace.SMEM),   # index table
            pl.BlockSpec(memory_space=pltpu.MemorySpace.VMEM),   # X resident
        ],
        out_specs=pl.BlockSpec(memory_space=pltpu.MemorySpace.VMEM),
        cost_estimate=pl.CostEstimate(
            flops=0,
            transcendentals=0,
            bytes_accessed=int(np.dtype(X.dtype).itemsize) * (R + TKB) * ND
                           + 4 * TKB,
        ),
    )(idx, x3)

    # Rows are already in (b, t, k) order -> free reshape, no transpose.
    return out.reshape(B, Tq, K, N, D)


# ----------------------------------------------------------------------------
# Full forward pass
# ----------------------------------------------------------------------------
def fft_selector_forward(X, K, wq, wk, bq, bk, compute_dtype=jnp.bfloat16):
    B, T, N, D = X.shape
    x_pack = X.reshape(B * T, N * D)

    q, k = qk_fused_linear(x_pack, wq, wk, bq, bk, compute_dtype)
    q = q.reshape(B, T, -1)
    k = k.reshape(B, T, -1)

    # TODO(synk): FFT / top-k / argsort have no Pallas TPU lowering; XLA glue.
    q_fft = jnp.fft.rfft(q)
    k_fft = jnp.fft.rfft(k)
    cross_corr_fft = q_fft[:, :, None, :] * jnp.conj(k_fft)[:, None, :, :]
    cross_corr = jnp.fft.ifft(cross_corr_fft, axis=-1).real
    corr_matrix = cross_corr.mean(axis=-1).mean(axis=0)
    corr_matrix = jnp.where(jnp.eye(T, dtype=bool), -jnp.inf, corr_matrix)

    topk_values, topk_indices = jax.lax.top_k(corr_matrix, K)
    order = jnp.argsort(topk_indices, axis=-1)
    sorted_values = jnp.take_along_axis(topk_values, order, axis=1)
    sorted_indices = jnp.take_along_axis(topk_indices, order, axis=1).astype(jnp.int32)

    sorted_values_from_X = gather_topk_from_x(X, sorted_indices)
    return sorted_values, sorted_indices, sorted_values_from_X


# ----------------------------------------------------------------------------
# Pure-JAX reference (mirrors the PyTorch forward; same bf16 matmul inputs so
# the comparison is apples-to-apples)
# ----------------------------------------------------------------------------
def reference_forward(X, K, wq, wk, bq, bk, compute_dtype=jnp.bfloat16):
    B, T, N, D = X.shape
    x2 = X.reshape(B * T, N * D)
    q = (jnp.dot(x2.astype(compute_dtype), wq.astype(compute_dtype),
                 preferred_element_type=jnp.float32) + bq).reshape(B, T, -1)
    k = (jnp.dot(x2.astype(compute_dtype), wk.astype(compute_dtype),
                 preferred_element_type=jnp.float32) + bk).reshape(B, T, -1)
    q_fft = jnp.fft.rfft(q)
    k_fft = jnp.fft.rfft(k)
    cc = jnp.fft.ifft(q_fft[:, :, None, :] * jnp.conj(k_fft)[:, None, :, :],
                      axis=-1).real
    corr = cc.mean(axis=-1).mean(axis=0)
    corr = jnp.where(jnp.eye(T, dtype=bool), -jnp.inf, corr)
    tv, ti = jax.lax.top_k(corr, K)
    order = jnp.argsort(ti, axis=-1)
    sv = jnp.take_along_axis(tv, order, axis=1)
    si = jnp.take_along_axis(ti, order, axis=1)
    gathered = X[:, si, :, :]            # (B, T, K, N, D)
    return sv, si, gathered


if __name__ == "__main__":
    # Small shapes consistent with the module: X is (B, T, N, D)
    B, T, N, D = 2, 8, 4, 16             # num_nodes N = 4, model_dim D = 16
    F = 32                               # feed_forward_dim
    Ktop = 3
    M = N * D                            # in_features of q_linear / k_linear

    key = jax.random.PRNGKey(0)
    kx, kwq, kwk, kbq, kbk = jax.random.split(key, 5)
    X = jax.random.normal(kx, (B, T, N, D), dtype=jnp.float32)

    # PyTorch Linear-style uniform(-1/sqrt(M), 1/sqrt(M)) init, stored directly
    # as (in_features, out_features).
    bound = 1.0 / np.sqrt(M)
    wq = jax.random.uniform(kwq, (M, F), jnp.float32, -bound, bound)
    wk = jax.random.uniform(kwk, (M, F), jnp.float32, -bound, bound)
    bq = jax.random.uniform(kbq, (F,), jnp.float32, -bound, bound)
    bk = jax.random.uniform(kbk, (F,), jnp.float32, -bound, bound)

    sv, si, sx = fft_selector_forward(X, Ktop, wq, wk, bq, bk)
    jax.block_until_ready((sv, si, sx))

    rv, ri, rx = reference_forward(X, Ktop, wq, wk, bq, bk)
    np.testing.assert_array_equal(np.asarray(si), np.asarray(ri))
    np.testing.assert_allclose(np.asarray(sv), np.asarray(rv), rtol=2e-3, atol=2e-3)
    # Gather is an exact row copy -> bit-identical to the reference gather.
    np.testing.assert_array_equal(np.asarray(sx), np.asarray(rx))

    assert sv.shape == (T, Ktop)
    assert si.shape == (T, Ktop)
    assert sx.shape == (B, T, Ktop, N, D)
    print("KERNEL_OK")
</pallas_src>

<mosaic_0001>
module attributes {stable_mosaic.version = 11 : i64} {
  func.func @_qk_fused_kernel(%arg0: i32, %arg1: memref<16x64xbf16, #tpu.memory_space<vmem>>, %arg2: memref<64x128xbf16, #tpu.memory_space<vmem>>, %arg3: memref<1x128xf32, #tpu.memory_space<vmem>>, %arg4: memref<16x128xf32, #tpu.memory_space<vmem>>) attributes {dimension_semantics = [#tpu.dimension_semantics<parallel>], iteration_bounds = array<i64: 1>, scalar_prefetch = 0 : i64, scratch_operands = 0 : i64, tpu.core_type = #tpu.core_type<tc>, window_params = [{transform_indices = @transform_0, window_bounds = array<i64: 16, 64>}, {pipeline_mode = #tpu.pipeline_mode<synchronous>, transform_indices = @transform_1, window_bounds = array<i64: 64, 128>}, {pipeline_mode = #tpu.pipeline_mode<synchronous>, transform_indices = @transform_2, window_bounds = array<i64: 1, 128>}, {transform_indices = @transform_3, window_bounds = array<i64: 16, 128>}]} {
    %c0 = arith.constant 0 : index
    %c0_0 = arith.constant 0 : index
    %0 = vector.load %arg1[%c0, %c0_0] : memref<16x64xbf16, #tpu.memory_space<vmem>>, vector<16x64xbf16>
    %c0_1 = arith.constant 0 : index
    %c0_2 = arith.constant 0 : index
    %1 = vector.load %arg2[%c0_1, %c0_2] : memref<64x128xbf16, #tpu.memory_space<vmem>>, vector<64x128xbf16>
    %cst = arith.constant dense<0.000000e+00> : vector<16x128xf32>
    %2 = tpu.matmul %0, %1, %cst {dimension_numbers = #tpu.dot_dimension_numbers<[1], [0], [0], [1], [0, 0, 1, 1], [], []>} : vector<16x64xbf16>, vector<64x128xbf16>, vector<16x128xf32> -> vector<16x128xf32>
    %c0_3 = arith.constant 0 : index
    %c0_4 = arith.constant 0 : index
    %3 = vector.load %arg3[%c0_3, %c0_4] : memref<1x128xf32, #tpu.memory_space<vmem>>, vector<1x128xf32>
    %4 = vector.broadcast %3 : vector<1x128xf32> to vector<16x128xf32>
    %5 = arith.addf %2, %4 : vector<16x128xf32>
    %c0_5 = arith.constant 0 : index
    %c0_6 = arith.constant 0 : index
    %6 = vector.load %arg4[%c0_5, %c0_6] : memref<16x128xf32, #tpu.memory_space<vmem>>, vector<16x128xf32>
    tpu.vector_store %arg4[%c0_5, %c0_6], %5 {strides = array<i32>} : memref<16x128xf32, #tpu.memory_space<vmem>>, vector<16x128xf32>,
    return
  }
  func.func @transform_0(%arg0: i32) -> (i32, i32) {
    %c0_i32 = arith.constant 0 : i32
    %c0_i32_0 = arith.constant 0 : i32
    return %arg0, %c0_i32 : i32, i32
  }
  func.func @transform_1(%arg0: i32) -> (i32, i32) {
    %c0_i32 = arith.constant 0 : i32
    %c0_i32_0 = arith.constant 0 : i32
    %c0_i32_1 = arith.constant 0 : i32
    return %c0_i32, %c0_i32_0 : i32, i32
  }
  func.func @transform_2(%arg0: i32) -> (i32, i32) {
    %c0_i32 = arith.constant 0 : i32
    %c0_i32_0 = arith.constant 0 : i32
    %c0_i32_1 = arith.constant 0 : i32
    return %c0_i32, %c0_i32_0 : i32, i32
  }
  func.func @transform_3(%arg0: i32) -> (i32, i32) {
    %c0_i32 = arith.constant 0 : i32
    %c0_i32_0 = arith.constant 0 : i32
    return %arg0, %c0_i32 : i32, i32
  }
}

</mosaic_0001>

<llo_original>
// kernel: tpu_custom_call.1
$region0: #{tpu_custom_call.1}
  #allocation0 [shape = 'u32[]', space=smem, size = 0x4, offset = 0x4, fixed_abs, tag = 'smem constant byte address 0x4 - core index']
  #allocation1 [shape = 'u32[144,128]{1,0:T(1,128)}', space=vmem, size = 0x12000, scoped, tag = 'internal scratch']
  %s0 = inlined_call_operand.hbm [shape: bf16[16,64], index: 0, kind: input, shape index: {}]
  %s1 = inlined_call_operand.hbm [shape: bf16[64,128], index: 1, kind: input, shape index: {}]
  %s2 = inlined_call_operand.vmem [shape: f32[1,128], index: 2, kind: input, shape index: {}]
  %s3 = inlined_call_operand.hbm [shape: f32[16,128], index: 3, kind: output, shape index: {}]
  %s4 = sld [smem:[#allocation0]]
  $region30: #{tpu_custom_call.1} parent=0
    _
  %s6 = ssub.s32 1, %s4
  %s7 = scalar_select 0, %s6, %s4
  $region1: #{tpu_custom_call.1} parent=0
    #allocation2 [shape = 'u8[4096]{0}', space=vmem, size = 0x1000, scoped, tag = 'input window, operand 0, single buffered']
    #allocation3 [shape = 's32[1]{0}', space=sflag, size = 0x4, scoped, tag = 'scoped memory for tpu_custom_call.1']
    #allocation4 [shape = 's32[1]{0}', space=sflag, size = 0x4, scoped, tag = 'scoped memory for tpu_custom_call.1']
    #allocation5 [shape = 'u8[16384]{0}', space=vmem, size = 0x4000, scoped, tag = 'input window, operand 1, single buffered']
    #allocation6 [shape = 's32[1]{0}', space=sflag, size = 0x4, scoped, tag = 'scoped memory for tpu_custom_call.1']
    #allocation7 [shape = 'u8[8192]{0}', space=vmem, size = 0x2000, scoped, tag = 'output window, operand 0, single buffered']
    %8 = vsyncpa [#allocation3], 0
    %9 = vsyncpa [#allocation6], 0
    %10 = vsyncpa [#allocation4], 0
    // Predicated region
    $region2: #{tpu_custom_call.1} parent=1 // pred_check
      _
    $region3: #{tpu_custom_call.1} parent=1 // pred_check_branch
      %12 = sbr.rel (0) target = $region5
    $region4: #{tpu_custom_call.1} parent=1 // pred_region
      %s14 = ssub.s32 128, 128
      %15 = vsyncadd [#allocation3], %s14
      %s16 = sshll.u32 [#allocation2], 4
      %s17 = int_to_ptr.vmem [resolvable:$true] %s16
      %22 = dma.hbm_to_vmem [thread:$0]  %s0, 128, %s17, [#allocation3], 64, 64, 4
    $region5: #{tpu_custom_call.1} parent=1 // pred_fallthru
      _
    // Predicated region
    $region6: #{tpu_custom_call.1} parent=1 // pred_check
      _
    $region7: #{tpu_custom_call.1} parent=1 // pred_check_branch
      %24 = sbr.rel (0) target = $region9
    $region8: #{tpu_custom_call.1} parent=1 // pred_region
      %s26 = ssub.s32 512, 512
      %27 = vsyncadd [#allocation6], %s26
      %s28 = sshll.u32 [#allocation5], 4
      %s29 = int_to_ptr.vmem [resolvable:$true] %s28
      %34 = dma.hbm_to_vmem [thread:$0]  %s1, 512, %s29, [#allocation6], 64, 64, 4
    $region9: #{tpu_custom_call.1} parent=1 // pred_fallthru
      _
    // Predicated region
    $region10: #{tpu_custom_call.1} parent=1 // pred_check
      _
    $region11: #{tpu_custom_call.1} parent=1 // pred_check_branch
      %36 = sbr.rel (0) target = $region13
    $region12: #{tpu_custom_call.1} parent=1 // pred_region
      _
    $region13: #{tpu_custom_call.1} parent=1 // pred_fallthru
      _
    // Predicated region
    $region14: #{tpu_custom_call.1} parent=1 // pred_check
      _
    $region15: #{tpu_custom_call.1} parent=1 // pred_check_branch
      %38 = sbr.rel (0) target = $region17
    $region16: #{tpu_custom_call.1} parent=1 // pred_region
      %39 = dma.done [#allocation3], 128
    $region17: #{tpu_custom_call.1} parent=1 // pred_fallthru
      _
    // Predicated region
    $region18: #{tpu_custom_call.1} parent=1 // pred_check
      _
    $region19: #{tpu_custom_call.1} parent=1 // pred_check_branch
      %41 = sbr.rel (0) target = $region21
    $region20: #{tpu_custom_call.1} parent=1 // pred_region
      %42 = dma.done [#allocation6], 512
    $region21: #{tpu_custom_call.1} parent=1 // pred_fallthru
      _
    %v44 = vld [vmem:[#allocation2] sm:$0xf]
    %v45 = vld [vmem:[#allocation2 + $0x4] sm:$0xf]
    %v46 = vld [vmem:[#allocation5] sm:$0xf]
    %v47 = vld [vmem:[#allocation5 + $0x4] sm:$0xf]
    %v48 = vld [vmem:[#allocation5 + $0x8] sm:$0xf]
    %v49 = vld [vmem:[#allocation5 + $0xc] sm:$0xf]
    %v50 = vld [vmem:[#allocation5 + $0x10] sm:$0xf]
    %v51 = vld [vmem:[#allocation5 + $0x14] sm:$0xf]
    %v52 = vld [vmem:[#allocation5 + $0x18] sm:$0xf]
    %v53 = vld [vmem:[#allocation5 + $0x1c] sm:$0xf]
    %v54 = vld [vmem:[%s2] sm:$0x1]
    %v56 = vlaneseq
    %v57 = vshrl.u32 %v56, 7
    %v58 = vsub.s32 0, %v57
    %v59 = vrot.slane %v54, %v58
    %v63 = vunpack.c.l.b16 %v44
    %v64 = vunpack.c.l.b16 %v45
    %v65 = vpack.c.b16 %v64, %v63
    %v74 = vunpack.c.l.b16 %v46
    %v75 = vunpack.c.l.b16 %v47
    %v76 = vunpack.c.l.b16 %v48
    %v77 = vunpack.c.l.b16 %v49
    %v78 = vunpack.c.l.b16 %v50
    %v79 = vunpack.c.l.b16 %v51
    %v80 = vunpack.c.l.b16 %v52
    %v81 = vunpack.c.l.b16 %v53
    %v82 = vpack.c.b16 %v75, %v74
    %v83 = vpack.c.b16 %v77, %v76
    %v84 = vpack.c.b16 %v79, %v78
    %v85 = vpack.c.b16 %v81, %v80
    %vm90 = vcmask 523264
    %v92 = vsel %vm90, %v65, 0
    %94 = vmatprep.subr.bf16.mxu0 0
    %95 = vmatpush1.bf16.msra.mxu0 %v82
    %96 = vmatprep.subr.bf16.mxu0 0
    %97 = vmatpush1.bf16.msra.mxu0 %v83
    %98 = vmatprep.subr.bf16.mxu0 0
    %99 = vmatpush1.bf16.msra.mxu0 %v84
    %100 = vmatprep.subr.bf16.mxu0 0
    %101 = vmatpush1.bf16.msra.mxu0 %v85
    %102 = vmatprep.subr.bf16.mxu0 0
    %103 = vmatpush1.bf16.msra.mxu0 0
    %104 = vmatprep.subr.bf16.mxu0 0
    %105 = vmatpush1.bf16.msra.mxu0 0
    %106 = vmatprep.subr.bf16.mxu0 0
    %107 = vmatpush1.bf16.msra.mxu0 0
    %108 = vmatprep.subr.bf16.mxu0 0
    %109 = vmatpush1.bf16.msra.mxu0 0
    %110 = vmatprep.subr.bf16.mxu0 0
    %111 = vmatpush1.bf16.msra.mxu0 0
    %112 = vmatprep.subr.bf16.mxu0 0
    %113 = vmatpush1.bf16.msra.mxu0 0
    %114 = vmatprep.subr.bf16.mxu0 0
    %115 = vmatpush1.bf16.msra.mxu0 0
    %116 = vmatprep.subr.bf16.mxu0 0
    %117 = vmatpush1.bf16.msra.mxu0 0
    %118 = vmatprep.subr.bf16.mxu0 0
    %119 = vmatpush1.bf16.msra.mxu0 0
    %120 = vmatprep.subr.bf16.mxu0 0
    %121 = vmatpush1.bf16.msra.mxu0 0
    %122 = vmatprep.subr.bf16.mxu0 0
    %123 = vmatpush1.bf16.msra.mxu0 0
    %124 = vmatprep.subr.bf16.mxu0 0
    %125 = vmatpush1.bf16.msra.mxu0 0
    %126 = vmatprep.mubr.bf16.mxu0 0
    %127 = vmatmul.mubr.bf16.gmra.mrb[0].mxu0 %v92
    %v128 = vpop.f32.mrb[0].mxu0
    %v129 = vadd.f32 %v59, %v128
    %v130 = vpop.f32.mrb[0].mxu0
    %v131 = vpop.f32.mrb[0].mxu0
    %v132 = vadd.f32 %v59, %v131
    %v133 = vpop.f32.mrb[0].mxu0
    %134 = vdwg.mxu0
    %135 = vst [vmem:[#allocation7] sm:$0xff] %v129
    %136 = vst [vmem:[#allocation7 + $0x8] sm:$0xff] %v132
    // Predicated region
    $region22: #{tpu_custom_call.1} parent=1 // pred_check
      _
    $region23: #{tpu_custom_call.1} parent=1 // pred_check_branch
      %138 = sbr.rel (0) target = $region25
    $region24: #{tpu_custom_call.1} parent=1 // pred_region
      %s140 = ssub.s32 256, 256
      %141 = vsyncadd [#allocation4], %s140
      %s142 = sshll.u32 [#allocation7], 4
      %s143 = int_to_ptr.vmem [resolvable:$true] %s142
      %148 = dma.vmem_to_hbm [thread:$0]  %s143, 256, %s3, [#allocation4], 128, 128, 8
    $region25: #{tpu_custom_call.1} parent=1 // pred_fallthru
      _
    // Predicated region
    $region26: #{tpu_custom_call.1} parent=1 // pred_check
      _
    $region27: #{tpu_custom_call.1} parent=1 // pred_check_branch
      %150 = sbr.rel (0) target = $region29
    $region28: #{tpu_custom_call.1} parent=1 // pred_region
      %151 = dma.done [#allocation4], 256
    $region29: #{tpu_custom_call.1} parent=1 // pred_fallthru
      _
    %152 = vsyncpa [#allocation3], 1
    %153 = vsyncpa [#allocation6], 1
    %154 = vsyncpa [#allocation4], 1

</llo_original>
